<compile_context>
chip_gen: v7x
topology: tpu7x:2x2x1
jax: 0.10.0
libtpu: 0.0.40
codegen_flags: <defaults>
</compile_context>

<pallas_src>
import jax
import jax.numpy as jnp
from jax import lax
from jax.experimental import pallas as pl
from jax.experimental.pallas import tpu as pltpu


def _round_up(x, m):
    return (x + m - 1) // m * m


# ------------------------------- Pallas kernels --------------------------------------


def _conv_stats_kernel(w_ref, p_ref, sum_ref, sumsq_ref):
    # w_ref:  (Cout, K)   compute dtype (f32 or bf16)
    # p_ref:  (K, TM)     compute dtype -- one M-tile of transposed im2col patches
    # sum_ref, sumsq_ref: (Cout, 1) f32 -- resident accumulators across the grid
    @pl.when(pl.program_id(0) == 0)
    def _():
        sum_ref[...] = jnp.zeros_like(sum_ref)
        sumsq_ref[...] = jnp.zeros_like(sumsq_ref)

    conv = jnp.dot(w_ref[...], p_ref[...], preferred_element_type=jnp.float32)
    sum_ref[...] += jnp.sum(conv, axis=1, keepdims=True)
    sumsq_ref[...] += jnp.sum(conv * conv, axis=1, keepdims=True)


def _conv_norm_kernel(w_ref, p_ref, scale_ref, shift_ref, o_ref):
    # o = scale * (w @ p) + shift   per channel (sublane), lane-dense over the M tile.
    conv = jnp.dot(w_ref[...], p_ref[...], preferred_element_type=jnp.float32)
    o_ref[...] = conv * scale_ref[...] + shift_ref[...]


# ------------------------------- wrapper ---------------------------------------------


def _im2col_t(x, kernel_size, stride, padding):
    """(N, Cin, H, W) -> transposed patches (Cin*KH*KW, N*Hout*Wout).

    K is ordered (ci, kh, kw) to match weight.reshape(Cout, Cin*KH*KW);
    M is ordered (n, ho, wo).
    """
    n, cin, h, w = x.shape
    kh, kw = kernel_size
    sh, sw = stride
    ph, pw = padding
    x_pad = jnp.pad(x, ((0, 0), (0, 0), (ph, ph), (pw, pw)))
    hout = (h + 2 * ph - kh) // sh + 1
    wout = (w + 2 * pw - kw) // sw + 1

    cols = []
    for i in range(kh):
        for j in range(kw):
            cols.append(x_pad[:, :, i:i + sh * hout:sh, j:j + sw * wout:sw])
    # (N, Cin, KH*KW, Hout, Wout) -> (Cin, KH*KW, N, Hout, Wout) -> (K, M)
    p = jnp.stack(cols, axis=2)
    p = p.transpose(1, 2, 0, 3, 4).reshape(cin * kh * kw, n * hout * wout)
    return p, hout, wout


def _conv2d_batchnorm(x, weight, bias, gamma, beta, *, stride=(1, 1), padding=(0, 0),
                      eps=1e-5, block_m=2048, compute_dtype=jnp.float32):
    """Forward of Conv2DBatchNorm (conv -> BatchNorm2d with batch statistics).

    x:      (N, Cin, H, W)  f32, NCHW (PyTorch layout)
    weight: (Cout, Cin, KH, KW) f32, OIHW (PyTorch layout)
    bias, gamma, beta: (Cout,) f32
    returns (N, Cout, Hout, Wout) f32
    """
    n, cin, h, w = x.shape
    cout, _, kh, kw = weight.shape
    del bias  # exactly cancelled by the training-mode BN mean subtraction

    patches_t, hout, wout = _im2col_t(x, (kh, kw), stride, padding)   # (K, M)
    k, m = patches_t.shape

    # --- M (lane-axis) tiling ---
    tm = _round_up(max(128, min(block_m, _round_up(m, 128))), 128)
    m_pad = _round_up(m, tm)
    num_tiles = m_pad // tm
    if m_pad != m:
        # Zero-padded columns produce conv == 0 (no bias) -> contribute 0 to both sums.
        patches_t = jnp.pad(patches_t, ((0, 0), (0, m_pad - m)))

    patches_t = patches_t.astype(compute_dtype)
    w_mat = weight.reshape(cout, cin * kh * kw).astype(compute_dtype)

    itemsize = jnp.dtype(compute_dtype).itemsize
    tile_bytes = (2 * k * tm * itemsize        # double-buffered patches tile
                  + 2 * cout * k * itemsize    # weight block
                  + 2 * cout * tm * 4          # double-buffered f32 output tile
                  + 2 * cout * tm * 4          # f32 conv intermediate headroom
                  + 8 * cout * 4)              # scale/shift/sum/sumsq blocks
    vmem_limit = int(min(max(2 * tile_bytes + (4 << 20), 16 << 20), 32 << 20))

    flops_conv = 2 * cout * k * m_pad
    bytes_p = k * m_pad * itemsize
    bytes_w = cout * k * itemsize

    # ---- pass 1: conv + per-channel sum / sum-of-squares accumulation ----
    ch_sum, ch_sumsq = pl.pallas_call(
        _conv_stats_kernel,
        out_shape=(jax.ShapeDtypeStruct((cout, 1), jnp.float32),
                   jax.ShapeDtypeStruct((cout, 1), jnp.float32)),
        grid=(num_tiles,),
        in_specs=[pl.BlockSpec((cout, k), lambda i: (0, 0)),
                  pl.BlockSpec((k, tm), lambda i: (0, i))],
        out_specs=(pl.BlockSpec((cout, 1), lambda i: (0, 0)),
                   pl.BlockSpec((cout, 1), lambda i: (0, 0))),
        compiler_params=pltpu.CompilerParams(
            dimension_semantics=("arbitrary",),   # resident accumulators across grid
            vmem_limit_bytes=vmem_limit),
        cost_estimate=pl.CostEstimate(
            flops=flops_conv + 4 * cout * m_pad, transcendentals=0,
            bytes_accessed=bytes_p + bytes_w + 2 * cout * 4),
    )(w_mat, patches_t)

    # Tiny (Cout, 1) stats math stays in plain XLA; divide by the true M (not M_pad).
    inv_m = 1.0 / float(m)
    mean = ch_sum * inv_m                                    # (Cout, 1)
    var = jnp.maximum(ch_sumsq * inv_m - mean * mean, 0.0)   # biased var (training mode)
    inv_std = lax.rsqrt(var + eps)
    scale = gamma.reshape(cout, 1).astype(jnp.float32) * inv_std
    shift = beta.reshape(cout, 1).astype(jnp.float32) - mean * scale

    # ---- pass 2: recompute conv per tile, apply folded BN affine (fully parallel) ----
    out_full = pl.pallas_call(
        _conv_norm_kernel,
        out_shape=jax.ShapeDtypeStruct((cout, m_pad), jnp.float32),
        grid=(num_tiles,),
        in_specs=[pl.BlockSpec((cout, k), lambda i: (0, 0)),
                  pl.BlockSpec((k, tm), lambda i: (0, i)),
                  pl.BlockSpec((cout, 1), lambda i: (0, 0)),
                  pl.BlockSpec((cout, 1), lambda i: (0, 0))],
        out_specs=pl.BlockSpec((cout, tm), lambda i: (0, i)),
        compiler_params=pltpu.CompilerParams(
            dimension_semantics=("parallel",),    # independent tiles -> both TCs on v7x
            vmem_limit_bytes=vmem_limit),
        cost_estimate=pl.CostEstimate(
            flops=flops_conv + 2 * cout * m_pad, transcendentals=0,
            bytes_accessed=bytes_p + bytes_w + cout * m_pad * 4 + 2 * cout * 4),
    )(w_mat, patches_t, scale, shift)

    # (Cout, M) -> NCHW.  Kept because the PyTorch module returns NCHW; this is only a
    # leading-axes permute (W stays on the lane axis).
    out = out_full[:, :m].reshape(cout, n, hout, wout).transpose(1, 0, 2, 3)
    return out


conv2d_batchnorm = jax.jit(
    _conv2d_batchnorm,
    static_argnames=("stride", "padding", "eps", "block_m", "compute_dtype"))


# ------------------------------- reference & test ------------------------------------


def _reference(x, weight, bias, gamma, beta, stride, padding, eps=1e-5):
    conv = lax.conv_general_dilated(
        x, weight, window_strides=stride,
        padding=[(padding[0], padding[0]), (padding[1], padding[1])],
        dimension_numbers=("NCHW", "OIHW", "NCHW"))
    conv = conv + bias[None, :, None, None]
    mean = jnp.mean(conv, axis=(0, 2, 3), keepdims=True)
    var = jnp.mean((conv - mean) ** 2, axis=(0, 2, 3), keepdims=True)  # biased
    return gamma[None, :, None, None] * (conv - mean) * lax.rsqrt(var + eps) \
        + beta[None, :, None, None]


if __name__ == "__main__":
    key = jax.random.PRNGKey(0)
    k_x, k_w, k_b = jax.random.split(key, 3)

    # Module config: Conv2DBatchNorm(in_channels=4, out_channels=8, kernel_size=3,
    #                                stride=(1, 1), padding=1)
    N, Cin, H, W = 2, 4, 16, 16
    Cout, KH, KW = 8, 3, 3
    stride, padding = (1, 1), (1, 1)

    x = jax.random.normal(k_x, (N, Cin, H, W), dtype=jnp.float32)
    fan_in = Cin * KH * KW
    bound = 1.0 / (fan_in ** 0.5)
    weight = jax.random.uniform(k_w, (Cout, Cin, KH, KW), jnp.float32, -bound, bound)
    bias = jax.random.uniform(k_b, (Cout,), jnp.float32, -bound, bound)
    gamma = jnp.ones((Cout,), jnp.float32)   # BatchNorm2d default init
    beta = jnp.zeros((Cout,), jnp.float32)   # BatchNorm2d default init

    ref = _reference(x, weight, bias, gamma, beta, stride, padding)

    # f32 MXU path; block_m=128 -> M=512 splits into a 4-step grid so the cross-tile
    # stats accumulation (pl.when init + resident accumulator) is actually exercised.
    out = conv2d_batchnorm(x, weight, bias, gamma, beta,
                           stride=stride, padding=padding, block_m=128)
    out = jax.block_until_ready(out)
    assert out.shape == (N, Cout, H, W), out.shape
    err = float(jnp.max(jnp.abs(out - ref)))
    assert jnp.allclose(out, ref, atol=2e-4, rtol=2e-4), err

    # bf16 MXU fast path (v6e/v7x): bf16 operands, f32 accumulation, f32 BN math.
    out_bf16 = conv2d_batchnorm(x, weight, bias, gamma, beta,
                                stride=stride, padding=padding, block_m=128,
                                compute_dtype=jnp.bfloat16)
    out_bf16 = jax.block_until_ready(out_bf16)
    err_bf16 = float(jnp.max(jnp.abs(out_bf16 - ref)))
    assert jnp.allclose(out_bf16, ref, atol=5e-2, rtol=5e-2), err_bf16

    print("KERNEL_OK")
</pallas_src>

<mosaic_0001>
module attributes {stable_mosaic.version = 11 : i64} {
  func.func @_conv_stats_kernel(%arg0: i32, %arg1: memref<8x36xf32, #tpu.memory_space<vmem>>, %arg2: memref<36x128xf32, #tpu.memory_space<vmem>>, %arg3: memref<8x1xf32, #tpu.memory_space<vmem>>, %arg4: memref<8x1xf32, #tpu.memory_space<vmem>>) attributes {dimension_semantics = [#tpu.dimension_semantics<arbitrary>], iteration_bounds = array<i64: 4>, scalar_prefetch = 0 : i64, scratch_operands = 0 : i64, tpu.core_type = #tpu.core_type<tc>, window_params = [{pipeline_mode = #tpu.pipeline_mode<synchronous>, transform_indices = @transform_0, window_bounds = array<i64: 8, 36>}, {transform_indices = @transform_1, window_bounds = array<i64: 36, 128>}, {pipeline_mode = #tpu.pipeline_mode<synchronous>, transform_indices = @transform_2, window_bounds = array<i64: 8, 1>}, {pipeline_mode = #tpu.pipeline_mode<synchronous>, transform_indices = @transform_3, window_bounds = array<i64: 8, 1>}]} {
    %c0_i32 = arith.constant 0 : i32
    %0 = arith.cmpi eq, %arg0, %c0_i32 : i32
    %1 = arith.extui %0 : i1 to i32
    %c0_i32_0 = arith.constant 0 : i32
    %2 = arith.cmpi ne, %1, %c0_i32_0 : i32
    scf.if %2 {
      %cst_14 = arith.constant 0.000000e+00 : f32
      %17 = vector.broadcast %cst_14 : f32 to vector<8x1xf32>
      %c0_15 = arith.constant 0 : index
      %c0_16 = arith.constant 0 : index
      %18 = vector.load %arg3[%c0_15, %c0_16] : memref<8x1xf32, #tpu.memory_space<vmem>>, vector<8x1xf32>
      tpu.vector_store %arg3[%c0_15, %c0_16], %17 {strides = array<i32>} : memref<8x1xf32, #tpu.memory_space<vmem>>, vector<8x1xf32>,
      %cst_17 = arith.constant 0.000000e+00 : f32
      %19 = vector.broadcast %cst_17 : f32 to vector<8x1xf32>
      %c0_18 = arith.constant 0 : index
      %c0_19 = arith.constant 0 : index
      %20 = vector.load %arg4[%c0_18, %c0_19] : memref<8x1xf32, #tpu.memory_space<vmem>>, vector<8x1xf32>
      tpu.vector_store %arg4[%c0_18, %c0_19], %19 {strides = array<i32>} : memref<8x1xf32, #tpu.memory_space<vmem>>, vector<8x1xf32>,
    } else {
    }
    %c0 = arith.constant 0 : index
    %c0_1 = arith.constant 0 : index
    %3 = vector.load %arg1[%c0, %c0_1] : memref<8x36xf32, #tpu.memory_space<vmem>>, vector<8x36xf32>
    %c0_2 = arith.constant 0 : index
    %c0_3 = arith.constant 0 : index
    %4 = vector.load %arg2[%c0_2, %c0_3] : memref<36x128xf32, #tpu.memory_space<vmem>>, vector<36x128xf32>
    %cst = arith.constant dense<0.000000e+00> : vector<8x128xf32>
    %5 = tpu.matmul %3, %4, %cst {dimension_numbers = #tpu.dot_dimension_numbers<[1], [0], [0], [1], [0, 0, 1, 1], [], []>} : vector<8x36xf32>, vector<36x128xf32>, vector<8x128xf32> -> vector<8x128xf32>
    %c0_4 = arith.constant 0 : index
    %c0_5 = arith.constant 0 : index
    %6 = vector.load %arg3[%c0_4, %c0_5] : memref<8x1xf32, #tpu.memory_space<vmem>>, vector<8x1xf32>
    %cst_6 = arith.constant dense<0.000000e+00> : vector<8xf32>
    %7 = vector.multi_reduction <add>, %5, %cst_6 [1] : vector<8x128xf32> to vector<8xf32>
    %8 = vector.shape_cast %7 : vector<8xf32> to vector<8x1xf32>
    %9 = arith.addf %6, %8 : vector<8x1xf32>
    %c0_7 = arith.constant 0 : index
    %c0_8 = arith.constant 0 : index
    %10 = vector.load %arg3[%c0_7, %c0_8] : memref<8x1xf32, #tpu.memory_space<vmem>>, vector<8x1xf32>
    tpu.vector_store %arg3[%c0_7, %c0_8], %9 {strides = array<i32>} : memref<8x1xf32, #tpu.memory_space<vmem>>, vector<8x1xf32>,
    %c0_9 = arith.constant 0 : index
    %c0_10 = arith.constant 0 : index
    %11 = vector.load %arg4[%c0_9, %c0_10] : memref<8x1xf32, #tpu.memory_space<vmem>>, vector<8x1xf32>
    %12 = arith.mulf %5, %5 : vector<8x128xf32>
    %cst_11 = arith.constant dense<0.000000e+00> : vector<8xf32>
    %13 = vector.multi_reduction <add>, %12, %cst_11 [1] : vector<8x128xf32> to vector<8xf32>
    %14 = vector.shape_cast %13 : vector<8xf32> to vector<8x1xf32>
    %15 = arith.addf %11, %14 : vector<8x1xf32>
    %c0_12 = arith.constant 0 : index
    %c0_13 = arith.constant 0 : index
    %16 = vector.load %arg4[%c0_12, %c0_13] : memref<8x1xf32, #tpu.memory_space<vmem>>, vector<8x1xf32>
    tpu.vector_store %arg4[%c0_12, %c0_13], %15 {strides = array<i32>} : memref<8x1xf32, #tpu.memory_space<vmem>>, vector<8x1xf32>,
    return
  }
  func.func @transform_0(%arg0: i32) -> (i32, i32) {
    %c0_i32 = arith.constant 0 : i32
    %c0_i32_0 = arith.constant 0 : i32
    %c0_i32_1 = arith.constant 0 : i32
    return %c0_i32, %c0_i32_0 : i32, i32
  }
  func.func @transform_1(%arg0: i32) -> (i32, i32) {
    %c0_i32 = arith.constant 0 : i32
    %c0_i32_0 = arith.constant 0 : i32
    return %c0_i32, %arg0 : i32, i32
  }
  func.func @transform_2(%arg0: i32) -> (i32, i32) {
    %c0_i32 = arith.constant 0 : i32
    %c0_i32_0 = arith.constant 0 : i32
    %c0_i32_1 = arith.constant 0 : i32
    return %c0_i32, %c0_i32_0 : i32, i32
  }
  func.func @transform_3(%arg0: i32) -> (i32, i32) {
    %c0_i32 = arith.constant 0 : i32
    %c0_i32_0 = arith.constant 0 : i32
    %c0_i32_1 = arith.constant 0 : i32
    return %c0_i32, %c0_i32_0 : i32, i32
  }
}

module attributes {stable_mosaic.version = 11 : i64} {
  func.func @_conv_norm_kernel(%arg0: i32, %arg1: memref<8x36xf32, #tpu.memory_space<vmem>>, %arg2: memref<36x128xf32, #tpu.memory_space<vmem>>, %arg3: memref<8x1xf32, #tpu.memory_space<vmem>>, %arg4: memref<8x1xf32, #tpu.memory_space<vmem>>, %arg5: memref<8x128xf32, #tpu.memory_space<vmem>>) attributes {dimension_semantics = [#tpu.dimension_semantics<parallel>], iteration_bounds = array<i64: 4>, scalar_prefetch = 0 : i64, scratch_operands = 0 : i64, tpu.core_type = #tpu.core_type<tc>, window_params = [{pipeline_mode = #tpu.pipeline_mode<synchronous>, transform_indices = @transform_0, window_bounds = array<i64: 8, 36>}, {transform_indices = @transform_1, window_bounds = array<i64: 36, 128>}, {pipeline_mode = #tpu.pipeline_mode<synchronous>, transform_indices = @transform_2, window_bounds = array<i64: 8, 1>}, {pipeline_mode = #tpu.pipeline_mode<synchronous>, transform_indices = @transform_3, window_bounds = array<i64: 8, 1>}, {transform_indices = @transform_4, window_bounds = array<i64: 8, 128>}]} {
    %c0 = arith.constant 0 : index
    %c0_0 = arith.constant 0 : index
    %0 = vector.load %arg1[%c0, %c0_0] : memref<8x36xf32, #tpu.memory_space<vmem>>, vector<8x36xf32>
    %c0_1 = arith.constant 0 : index
    %c0_2 = arith.constant 0 : index
    %1 = vector.load %arg2[%c0_1, %c0_2] : memref<36x128xf32, #tpu.memory_space<vmem>>, vector<36x128xf32>
    %cst = arith.constant dense<0.000000e+00> : vector<8x128xf32>
    %2 = tpu.matmul %0, %1, %cst {dimension_numbers = #tpu.dot_dimension_numbers<[1], [0], [0], [1], [0, 0, 1, 1], [], []>} : vector<8x36xf32>, vector<36x128xf32>, vector<8x128xf32> -> vector<8x128xf32>
    %c0_3 = arith.constant 0 : index
    %c0_4 = arith.constant 0 : index
    %3 = vector.load %arg3[%c0_3, %c0_4] : memref<8x1xf32, #tpu.memory_space<vmem>>, vector<8x1xf32>
    %4 = vector.broadcast %3 : vector<8x1xf32> to vector<8x128xf32>
    %5 = arith.mulf %2, %4 : vector<8x128xf32>
    %c0_5 = arith.constant 0 : index
    %c0_6 = arith.constant 0 : index
    %6 = vector.load %arg4[%c0_5, %c0_6] : memref<8x1xf32, #tpu.memory_space<vmem>>, vector<8x1xf32>
    %7 = vector.broadcast %6 : vector<8x1xf32> to vector<8x128xf32>
    %8 = arith.addf %5, %7 : vector<8x128xf32>
    %c0_7 = arith.constant 0 : index
    %c0_8 = arith.constant 0 : index
    %9 = vector.load %arg5[%c0_7, %c0_8] : memref<8x128xf32, #tpu.memory_space<vmem>>, vector<8x128xf32>
    tpu.vector_store %arg5[%c0_7, %c0_8], %8 {strides = array<i32>} : memref<8x128xf32, #tpu.memory_space<vmem>>, vector<8x128xf32>,
    return
  }
  func.func @transform_0(%arg0: i32) -> (i32, i32) {
    %c0_i32 = arith.constant 0 : i32
    %c0_i32_0 = arith.constant 0 : i32
    %c0_i32_1 = arith.constant 0 : i32
    return %c0_i32, %c0_i32_0 : i32, i32
  }
  func.func @transform_1(%arg0: i32) -> (i32, i32) {
    %c0_i32 = arith.constant 0 : i32
    %c0_i32_0 = arith.constant 0 : i32
    return %c0_i32, %arg0 : i32, i32
  }
  func.func @transform_2(%arg0: i32) -> (i32, i32) {
    %c0_i32 = arith.constant 0 : i32
    %c0_i32_0 = arith.constant 0 : i32
    %c0_i32_1 = arith.constant 0 : i32
    return %c0_i32, %c0_i32_0 : i32, i32
  }
  func.func @transform_3(%arg0: i32) -> (i32, i32) {
    %c0_i32 = arith.constant 0 : i32
    %c0_i32_0 = arith.constant 0 : i32
    %c0_i32_1 = arith.constant 0 : i32
    return %c0_i32, %c0_i32_0 : i32, i32
  }
  func.func @transform_4(%arg0: i32) -> (i32, i32) {
    %c0_i32 = arith.constant 0 : i32
    %c0_i32_0 = arith.constant 0 : i32
    return %c0_i32, %arg0 : i32, i32
  }
}

</mosaic_0001>

<llo_original>
// kernel: _conv2d_batchnorm.3
$region0: #{_conv2d_batchnorm.3}
  #allocation0 [shape = 'u32[]', space=smem, size = 0x4, offset = 0x4, fixed_abs, tag = 'smem constant byte address 0x4 - core index']
  #allocation1 [shape = 'u32[144,128]{1,0:T(1,128)}', space=vmem, size = 0x12000, scoped, tag = 'internal scratch']
  %s0 = inlined_call_operand.vmem [shape: f32[8,36], index: 0, kind: input, shape index: {}]
  %s1 = inlined_call_operand.vmem [shape: f32[36,512], index: 1, kind: input, shape index: {}]
  %s2 = inlined_call_operand.vmem [shape: f32[8,1], index: 2, kind: input, shape index: {}]
  %s3 = inlined_call_operand.vmem [shape: f32[8,1], index: 3, kind: input, shape index: {}]
  %s4 = inlined_call_operand.vmem [shape: f32[8,512], index: 4, kind: output, shape index: {}]
  %s5 = sld [smem:[#allocation0]]
  $region87: #{_conv2d_batchnorm.3} parent=0
    _
  %s7 = ssub.s32 1, %s5
  %s8 = scalar_select 0, %s7, %s5
  $region1: #{_conv2d_batchnorm.3} parent=0
    #allocation2 [shape = 'u8[40960]{0}', space=vmem, size = 0xa000, scoped, tag = 'input window, operand 1']
    loop: start=0, step=1, limit=6
    $region2: #{_conv2d_batchnorm.3} parent=1 // loop_pre_header
      _
    $region3: #{_conv2d_batchnorm.3} parent=1 // loop_header
      %s10 = sphi 0, %s14
      %p11 = scmp.ge.s32.totalorder %s10, 6
      %s18 = sphi 0, %s18
      %s20 = sphi 0, %s18
      %s21 = sphi 0, %s20
      %s35 = sphi 0, %s21
      %s41 = sphi 0, %s43
      %s44 = sphi 0, %s41
      %s45 = sphi 0, %s44
      %s61 = sphi 0, %s45
      %s65 = sphi 0, %s65
      %s67 = sphi 0, %s65
      %s68 = sphi 0, %s67
      %s82 = sphi 0, %s68
      %s86 = sphi 0, %s86
      %s88 = sphi 0, %s86
      %s89 = sphi 0, %s88
      %s103 = sphi 0, %s89
      %s109 = sphi 0, %s111
      %s112 = sphi 0, %s109
      %s113 = sphi 0, %s112
      %s129 = sphi 0, %s113
    $region4: #{_conv2d_batchnorm.3} parent=1 // loop_header_branch
      %13 = sbr.rel (%p11) target = $region8
    $region5: #{_conv2d_batchnorm.3} parent=1 // loop_body
      %s15 = ssub.s32 %s10, 1
      %s16 = ssub.s32 %s10, 2
      %s17 = sadd.s32 %s10, 1
      %s19 = sadd.s32 %s18, 1
      %p22 = scmp.eq.s32.totalorder %s10, 3
      %p23 = scmp.ne.s32.totalorder %s18, %s20
      %p24 = scmp.eq.s32.totalorder %s10, 0
      %p25 = por %p23, %p24
      %p26 = scmp.ne.s32.totalorder %s18, %s20
      %p27 = scmp.eq.s32.totalorder %s15, 3
      %p28 = por %p26, %p27
      %p29 = scmp.ne.s32.totalorder %s20, %s21
      %p30 = scmp.eq.s32.totalorder %s15, 0
      %p31 = por %p29, %p30
      %p32 = scmp.ne.s32.totalorder %s20, %s21
      %p33 = scmp.eq.s32.totalorder %s16, 3
      %p34 = por %p32, %p33
      %p36 = scmp.ne.s32.totalorder %s21, %s35
      %p37 = scmp.eq.s32.totalorder %s16, 0
      %p38 = por %p36, %p37
      %s39 = ssub.s32 %s10, %s17
      %p40 = scmp.eq.s32.totalorder %s39, 0
      %s42 = sadd.s32 %s41, 1
      %s43 = scalar_select %p40, %s41, %s42
      %p46 = pneg %p40
      %p47 = scmp.eq.s32.totalorder %s10, 3
      %p48 = por %p46, %p47
      %p49 = scmp.ne.s32.totalorder %s41, %s44
      %p50 = scmp.eq.s32.totalorder %s10, 0
      %p51 = por %p49, %p50
      %p52 = scmp.ne.s32.totalorder %s41, %s44
      %p53 = scmp.eq.s32.totalorder %s15, 3
      %p54 = por %p52, %p53
      %p55 = scmp.ne.s32.totalorder %s44, %s45
      %p56 = scmp.eq.s32.totalorder %s15, 0
      %p57 = por %p55, %p56
      %p58 = scmp.ne.s32.totalorder %s44, %s45
      %p59 = scmp.eq.s32.totalorder %s16, 3
      %p60 = por %p58, %p59
      %p62 = scmp.ne.s32.totalorder %s45, %s61
      %p63 = scmp.eq.s32.totalorder %s16, 0
      %p64 = por %p62, %p63
      %s66 = sadd.s32 %s65, 1
      %p69 = scmp.eq.s32.totalorder %s10, 3
      %p70 = scmp.ne.s32.totalorder %s65, %s67
      %p71 = scmp.eq.s32.totalorder %s10, 0
      %p72 = por %p70, %p71
      %p73 = scmp.ne.s32.totalorder %s65, %s67
      %p74 = scmp.eq.s32.totalorder %s15, 3
      %p75 = por %p73, %p74
      %p76 = scmp.ne.s32.totalorder %s67, %s68
      %p77 = scmp.eq.s32.totalorder %s15, 0
      %p78 = por %p76, %p77
      %p79 = scmp.ne.s32.totalorder %s67, %s68
      %p80 = scmp.eq.s32.totalorder %s16, 3
      %p81 = por %p79, %p80
      %p83 = scmp.ne.s32.totalorder %s68, %s82
      %p84 = scmp.eq.s32.totalorder %s16, 0
      %p85 = por %p83, %p84
      %s87 = sadd.s32 %s86, 1
      %p90 = scmp.eq.s32.totalorder %s10, 3
      %p91 = scmp.ne.s32.totalorder %s86, %s88
      %p92 = scmp.eq.s32.totalorder %s10, 0
      %p93 = por %p91, %p92
      %p94 = scmp.ne.s32.totalorder %s86, %s88
      %p95 = scmp.eq.s32.totalorder %s15, 3
      %p96 = por %p94, %p95
      %p97 = scmp.ne.s32.totalorder %s88, %s89
      %p98 = scmp.eq.s32.totalorder %s15, 0
      %p99 = por %p97, %p98
      %p100 = scmp.ne.s32.totalorder %s88, %s89
      %p101 = scmp.eq.s32.totalorder %s16, 3
      %p102 = por %p100, %p101
      %p104 = scmp.ne.s32.totalorder %s89, %s103
      %p105 = scmp.eq.s32.totalorder %s16, 0
      %p106 = por %p104, %p105
      %s107 = ssub.s32 %s10, %s17
      %p108 = scmp.eq.s32.totalorder %s107, 0
      %s110 = sadd.s32 %s109, 1
      %s111 = scalar_select %p108, %s109, %s110
      %p114 = pneg %p108
      %p115 = scmp.eq.s32.totalorder %s10, 3
      %p116 = por %p114, %p115
      %p117 = scmp.ne.s32.totalorder %s109, %s112
      %p118 = scmp.eq.s32.totalorder %s10, 0
      %p119 = por %p117, %p118
      %p120 = scmp.ne.s32.totalorder %s109, %s112
      %p121 = scmp.eq.s32.totalorder %s15, 3
      %p122 = por %p120, %p121
      %p123 = scmp.ne.s32.totalorder %s112, %s113
      %p124 = scmp.eq.s32.totalorder %s15, 0
      %p125 = por %p123, %p124
      %p126 = scmp.ne.s32.totalorder %s112, %s113
      %p127 = scmp.eq.s32.totalorder %s16, 3
      %p128 = por %p126, %p127
      %p130 = scmp.ne.s32.totalorder %s113, %s129
      %p131 = scmp.eq.s32.totalorder %s16, 0
      %p132 = por %p130, %p131
      %p133 = scmp.le.s32.totalorder 1, %s10
      %p134 = scmp.lt.s32.totalorder %s10, 5
      %p135 = pnand %p133, %p134
      %p136 = pneg %p135
      // Predicated region
      $region9: #{_conv2d_batchnorm.3} parent=5 // pred_check
        _
      $region10: #{_conv2d_batchnorm.3} parent=5 // pred_check_branch
        %138 = sbr.rel (%p135) target = $region12
      $region11: #{_conv2d_batchnorm.3} parent=5 // pred_region
        %s139 = ssub.s32 %s10, 1
        // Predicated region
        $region13: #{_conv2d_batchnorm.3} parent=11 // pred_check
          %p140 = pneg %p31
        $region14: #{_conv2d_batchnorm.3} parent=11 // pred_check_branch
          %142 = sbr.rel (%p140) target = $region16
        $region15: #{_conv2d_batchnorm.3} parent=11 // pred_region
          _
        $region16: #{_conv2d_batchnorm.3} parent=11 // pred_fallthru
          _
        // Predicated region
        $region17: #{_conv2d_batchnorm.3} parent=11 // pred_check
          %p143 = pneg %p78
        $region18: #{_conv2d_batchnorm.3} parent=11 // pred_check_branch
          %145 = sbr.rel (%p143) target = $region20
        $region19: #{_conv2d_batchnorm.3} parent=11 // pred_region
          _
        $region20: #{_conv2d_batchnorm.3} parent=11 // pred_fallthru
          _
        // Predicated region
        $region21: #{_conv2d_batchnorm.3} parent=11 // pred_check
          %p146 = pneg %p99
        $region22: #{_conv2d_batchnorm.3} parent=11 // pred_check_branch
          %148 = sbr.rel (%p146) target = $region24
        $region23: #{_conv2d_batchnorm.3} parent=11 // pred_region
          _
        $region24: #{_conv2d_batchnorm.3} parent=11 // pred_fallthru
          _
      $region12: #{_conv2d_batchnorm.3} parent=5 // pred_fallthru
        _
      %p149 = scmp.lt.s32.totalorder %s10, 4
      // Predicated region
      $region25: #{_conv2d_batchnorm.3} parent=5 // pred_check
        %p150 = pneg %p149
      $region26: #{_conv2d_batchnorm.3} parent=5 // pred_check_branch
        %152 = sbr.rel (%p150) target = $region28
      $region27: #{_conv2d_batchnorm.3} parent=5 // pred_region
        // Predicated region
        $region29: #{_conv2d_batchnorm.3} parent=27 // pred_check
          %p153 = pneg %p51
        $region30: #{_conv2d_batchnorm.3} parent=27 // pred_check_branch
          %155 = sbr.rel (%p153) target = $region32
        $region31: #{_conv2d_batchnorm.3} parent=27 // pred_region
          %s156 = sand.u32 %s41, 1
          %s157 = sand.u32 %s41, 1
          %s158 = smul.addr %s157, 40
          %s159 = scalar_lea.vmem [#allocation2], %s158
          %s160 = smul.addr %s10, 8
          %s161 = scalar_lea.vmem %s1, %s160
          // Predicated region
          $region33: #{_conv2d_batchnorm.3} parent=31 // pred_check
            _
          $region34: #{_conv2d_batchnorm.3} parent=31 // pred_check_branch
            %163 = sbr.rel (0) target = $region36
          $region35: #{_conv2d_batchnorm.3} parent=31 // pred_region
            // Predicated region
            $region37: #{_conv2d_batchnorm.3} parent=35 // pred_check
              _
            $region38: #{_conv2d_batchnorm.3} parent=35 // pred_check_branch
              %165 = sbr.rel (0) target = $region40
            $region39: #{_conv2d_batchnorm.3} parent=35 // pred_region
              // Predicated region
              $region52: #{_conv2d_batchnorm.3} parent=39 // pred_check
                _
              $region53: #{_conv2d_batchnorm.3} parent=39 // pred_check_branch
                %188 = sbr.rel (0) target = $region55
              $region54: #{_conv2d_batchnorm.3} parent=39 // pred_region
                loop: start=0, step=1, limit=1
                $region56: #{_conv2d_batchnorm.3} parent=54 // loop_pre_header
                  _
                $region57: #{_conv2d_batchnorm.3} parent=54 // loop_header
                  %s190 = sphi 0, %s194
                  %p191 = scmp.ge.s32.totalorder %s190, 1
                  %s195 = sphi %s161, %s161
                  %s196 = sphi %s159, %s159
                $region58: #{_conv2d_batchnorm.3} parent=54 // loop_header_branch
                  %193 = sbr.rel (%p191) target = $region62
                $region59: #{_conv2d_batchnorm.3} parent=54 // loop_body
                  %v197 = vld [vmem:[%s195] sm:$0xff]
                  %198 = vst [vmem:[%s196] sm:$0xff] %v197
                  %v199 = vld [vmem:[%s195 + $0x20] sm:$0xff]
                  %200 = vst [vmem:[%s196 + $0x8] sm:$0xff] %v199
                  %v201 = vld [vmem:[%s195 + $0x40] sm:$0xff]
                  %202 = vst [vmem:[%s196 + $0x10] sm:$0xff] %v201
                  %v203 = vld [vmem:[%s195 + $0x60] sm:$0xff]
                  %204 = vst [vmem:[%s196 + $0x18] sm:$0xff] %v203
                  %v205 = vld [vmem:[%s195 + $0x80] sm:$0xff]
                  %206 = vst [vmem:[%s196 + $0x20] sm:$0xff] %v205
                $region60: #{_conv2d_batchnorm.3} parent=54 // loop_footer
                  %s194 = sadd.s32 1, %s190
                $region61: #{_conv2d_batchnorm.3} parent=54 // loop_footer_branch
                  %189 = sbr.rel target = $region57
                $region62: #{_conv2d_batchnorm.3} parent=54 // loop_exit
                  _
              $region55: #{_conv2d_batchnorm.3} parent=39 // pred_fallthru
                _
              // Predicated region
              $region63: #{_conv2d_batchnorm.3} parent=39 // pred_check
                _
              $region64: #{_conv2d_batchnorm.3} parent=39 // pred_check_branch
                %208 = sbr.rel target = $region66
              $region65: #{_conv2d_batchnorm.3} parent=39 // pred_region
                _
              $region66: #{_conv2d_batchnorm.3} parent=39 // pred_fallthru
                _
            $region40: #{_conv2d_batchnorm.3} parent=35 // pred_fallthru
              _
            // Predicated region
            $region41: #{_conv2d_batchnorm.3} parent=35 // pred_check
              _
            $region42: #{_conv2d_batchnorm.3} parent=35 // pred_check_branch
              %167 = sbr.rel target = $region44
            $region43: #{_conv2d_batchnorm.3} parent=35 // pred_region
              loop: start=0, step=1, limit=1
              $region45: #{_conv2d_batchnorm.3} parent=43 // loop_pre_header
                _
              $region46: #{_conv2d_batchnorm.3} parent=43 // loop_header
                %s170 = sphi 0, %s174
                %p171 = scmp.ge.s32.totalorder %s170, 1
                %s175 = sphi %s161, %s161
                %s176 = sphi %s159, %s159
              $region47: #{_conv2d_batchnorm.3} parent=43 // loop_header_branch
                %173 = sbr.rel (%p171) target = $region51
              $region48: #{_conv2d_batchnorm.3} parent=43 // loop_body
                %v177 = vld [vmem:[%s175] sm:$0xff]
                %178 = vst [vmem:[%s176] sm:$0xff] %v177
                %v179 = vld [vmem:[%s175 + $0x20] sm:$0xff]
                %180 = vst [vmem:[%s176 + $0x8] sm:$0xff] %v179
                %v181 = vld [vmem:[%s175 + $0x40] sm:$0xff]
                %182 = vst [vmem:[%s176 + $0x10] sm:$0xff] %v181
                %v183 = vld [vmem:[%s175 + $0x60] sm:$0xff]
                %184 = vst [vmem:[%s176 + $0x18] sm:$0xff] %v183
                %v185 = vld [vmem:[%s175 + $0x80] sm:$0xff]
                %186 = vst [vmem:[%s176 + $0x20] sm:$0xff] %v185
              $region49: #{_conv2d_batchnorm.3} parent=43 // loop_footer
                %s174 = sadd.s32 1, %s170
              $region50: #{_conv2d_batchnorm.3} parent=43 // loop_footer_branch
                %169 = sbr.rel target = $region46
              $region51: #{_conv2d_batchnorm.3} parent=43 // loop_exit
                _
            $region44: #{_conv2d_batchnorm.3} parent=35 // pred_fallthru
              _
          $region36: #{_conv2d_batchnorm.3} parent=31 // pred_fallthru
            _
          %209 = vnop
        $region32: #{_conv2d_batchnorm.3} parent=27 // pred_fallthru
          _
      $region28: #{_conv2d_batchnorm.3} parent=5 // pred_fallthru
        _
      %p210 = scmp.le.s32.totalorder 1, %s10
      %p211 = scmp.lt.s32.totalorder %s10, 5
      %p212 = pnand %p210, %p211
      %p213 = pneg %p212
      // Predicated region
      $region67: #{_conv2d_batchnorm.3} parent=5 // pred_check
        _
      $region68: #{_conv2d_batchnorm.3} parent=5 // pred_check_branch
        %215 = sbr.rel (%p212) target = $region70
      $region69: #{_conv2d_batchnorm.3} parent=5 // pred_region
        %s216 = ssub.s32 %s10, 1
        %s217 = sand.u32 %s44, 1
        %s218 = sand.u32 %s44, 1
        %s219 = smul.addr %s218, 40
        %s220 = scalar_lea.vmem [#allocation2], %s219
        // Predicated region
        $region71: #{_conv2d_batchnorm.3} parent=69 // pred_check
          %p221 = pneg %p57
        $region72: #{_conv2d_batchnorm.3} parent=69 // pred_check_branch
          %223 = sbr.rel (%p221) target = $region74
        $region73: #{_conv2d_batchnorm.3} parent=69 // pred_region
          _
        $region74: #{_conv2d_batchnorm.3} parent=69 // pred_fallthru
          _
        %p224 = pneg %p31
        %p225 = pneg %p28
        %s226 = sand.u32 %s44, 1
        %s227 = sand.u32 %s44, 1
        %s228 = smul.addr %s227, 40
        %s229 = scalar_lea.vmem [#allocation2], %s228
        %p230 = pneg %p57
        %p231 = pneg %p54
        %p232 = pneg %p78
        %p233 = pneg %p75
        %p234 = pneg %p99
        %p235 = pneg %p96
        %p236 = pneg %p125
        %p237 = pneg %p122
        %p238 = scmp.lt.s32.totalorder %s15, 3
        %s239 = scalar_select %p238, %s15, 3
        %s240 = smul.addr %s239, 8
        %s241 = scalar_lea.vmem %s4, %s240
        %p242 = scmp.lt.s32.totalorder %s15, 3
        %s243 = scalar_select %p242, %s15, 3
        %s244 = smul.addr %s243, 8
        %s245 = scalar_lea.vmem %s4, %s244
        %v246 = vld [vmem:[%s0] sm:$0xff]
        %v247 = vld [vmem:[%s220] sm:$0xff]
        %v248 = vld [vmem:[%s220 + $0x8] sm:$0xff]
        %v249 = vld [vmem:[%s220 + $0x10] sm:$0xff]
        %v250 = vld [vmem:[%s220 + $0x18] sm:$0xff]
        %v251 = vld [vmem:[%s220 + $0x20] sm:$0xf]
        %vm252 = vcmask 293888
        %v254 = vsel %vm252, %v246, 0
        %vm256 = vcmask 1043456
        %v258 = vsel %vm256, %v251, 0
        %260 = vmatprep.subr.mxu0 0.0
        %261 = vmatpush1.msra.mxu0 %v247
        %262 = vmatprep.subr.mxu0 0.0
        %263 = vmatpush1.msra.mxu0 %v248
        %264 = vmatprep.subr.mxu0 0.0
        %265 = vmatpush1.msra.mxu0 %v249
        %266 = vmatprep.subr.mxu0 0.0
        %267 = vmatpush1.msra.mxu0 %v250
        %268 = vmatprep.subr.mxu0 0.0
        %269 = vmatpush1.msra.mxu0 %v258
        %270 = vmatprep.subr.mxu0 0.0
        %271 = vmatpush1.msra.mxu0 0.0
        %272 = vmatprep.subr.mxu0 0.0
        %273 = vmatpush1.msra.mxu0 0.0
        %274 = vmatprep.subr.mxu0 0.0
        %275 = vmatpush1.msra.mxu0 0.0
        %276 = vmatprep.subr.mxu0 0.0
        %277 = vmatpush1.msra.mxu0 0.0
        %278 = vmatprep.subr.mxu0 0.0
        %279 = vmatpush1.msra.mxu0 0.0
        %280 = vmatprep.subr.mxu0 0.0
        %281 = vmatpush1.msra.mxu0 0.0
        %282 = vmatprep.subr.mxu0 0.0
        %283 = vmatpush1.msra.mxu0 0.0
        %284 = vmatprep.subr.mxu0 0.0
        %285 = vmatpush1.msra.mxu0 0.0
        %286 = vmatprep.subr.mxu0 0.0
        %287 = vmatpush1.msra.mxu0 0.0
        %288 = vmatprep.subr.mxu0 0.0
        %289 = vmatpush1.msra.mxu0 0.0
        %290 = vmatprep.subr.mxu0 0.0
        %291 = vmatpush1.msra.mxu0 0.0
        %292 = vmatprep.subr.mxu0 0.0
        %293 = vmatpush1.msra.mxu0 0.0
        %294 = vmatprep.subr.mxu0 0.0
        %295 = vmatpush1.msra.mxu0 0.0
        %296 = vmatprep.subr.mxu0 0.0
        %297 = vmatpush1.msra.mxu0 0.0
        %298 = vmatprep.subr.mxu0 0.0
        %299 = vmatpush1.msra.mxu0 0.0
        %300 = vmatprep.subr.mxu0 0.0
        %301 = vmatpush1.msra.mxu0 0.0
        %302 = vmatprep.subr.mxu0 0.0
        %303 = vmatpush1.msra.mxu0 0.0
        %304 = vmatprep.subr.mxu0 0.0
        %305 = vmatpush1.msra.mxu0 0.0
        %306 = vmatprep.subr.mxu0 0.0
        %307 = vmatpush1.msra.mxu0 0.0
        %308 = vmatprep.subr.mxu0 0.0
        %309 = vmatpush1.msra.mxu0 0.0
        %310 = vmatprep.subr.mxu0 0.0
        %311 = vmatpush1.msra.mxu0 0.0
        %312 = vmatprep.subr.mxu0 0.0
        %313 = vmatpush1.msra.mxu0 0.0
        %314 = vmatprep.subr.mxu0 0.0
        %315 = vmatpush1.msra.mxu0 0.0
        %316 = vmatprep.subr.mxu0 0.0
        %317 = vmatpush1.msra.mxu0 0.0
        %318 = vmatprep.subr.mxu0 0.0
        %319 = vmatpush1.msra.mxu0 0.0
        %320 = vmatprep.subr.mxu0 0.0
        %321 = vmatpush1.msra.mxu0 0.0
        %322 = vmatprep.subr.mxu0 0.0
        %323 = vmatpush1.msra.mxu0 0.0
        %324 = vmatprep.mubr.f32.mxu0 0.0
        %325 = vmatmul.mubr.f32.gmra.mrb[0].mxu0 %v254
        %v326 = vpop.f32.mrb[0].mxu0
        %v327 = vadd.f32 0.0, %v326
        %v328 = vpop.f32.mrb[0].mxu0
        %329 = vdwg.mxu0
        %v330 = vld [vmem:[%s2] sm:$0xff]
        %332 = vset.pattern.permute.xlu0 0
        %333 = vperm.xlu0 %332, %v330
        %v334 = vpop.permute.xlu0 %333
        %v336 = vmul.f32 %v327, %v334
        %v337 = vld [vmem:[%s3] sm:$0xff]
        %339 = vset.pattern.permute.xlu0 0
        %340 = vperm.xlu0 %339, %v337
        %v341 = vpop.permute.xlu0 %340
        %v343 = vadd.f32 %v336, %v341
        %344 = vst [vmem:[%s245] sm:$0xff] %v343
        %p345 = scmp.lt.s32.totalorder %s15, 3
        %s346 = scalar_select %p345, %s15, 3
        %s347 = smul.addr %s346, 8
        %s348 = scalar_lea.vmem %s4, %s347
        // Predicated region
        $region75: #{_conv2d_batchnorm.3} parent=69 // pred_check
          %p349 = pneg %p122
        $region76: #{_conv2d_batchnorm.3} parent=69 // pred_check_branch
          %351 = sbr.rel (%p349) target = $region78
        $region77: #{_conv2d_batchnorm.3} parent=69 // pred_region
          _
        $region78: #{_conv2d_batchnorm.3} parent=69 // pred_fallthru
          _
      $region70: #{_conv2d_batchnorm.3} parent=5 // pred_fallthru
        _
      %p352 = scmp.le.s32.totalorder 2, %s10
      // Predicated region
      $region79: #{_conv2d_batchnorm.3} parent=5 // pred_check
        %p353 = pneg %p352
      $region80: #{_conv2d_batchnorm.3} parent=5 // pred_check_branch
        %355 = sbr.rel (%p353) target = $region82
      $region81: #{_conv2d_batchnorm.3} parent=5 // pred_region
        %s356 = ssub.s32 %s10, 2
        // Predicated region
        $region83: #{_conv2d_batchnorm.3} parent=81 // pred_check
          %p357 = pneg %p128
        $region84: #{_conv2d_batchnorm.3} parent=81 // pred_check_branch
          %359 = sbr.rel (%p357) target = $region86
        $region85: #{_conv2d_batchnorm.3} parent=81 // pred_region
          %p360 = scmp.lt.s32.totalorder %s16, 3
          %s361 = scalar_select %p360, %s16, 3
          %s362 = smul.addr %s361, 8
          %s363 = scalar_lea.vmem %s4, %s362
        $region86: #{_conv2d_batchnorm.3} parent=81 // pred_fallthru
          _
      $region82: #{_conv2d_batchnorm.3} parent=5 // pred_fallthru
        _
    $region6: #{_conv2d_batchnorm.3} parent=1 // loop_footer
      %s14 = sadd.s32 1, %s10
    $region7: #{_conv2d_batchnorm.3} parent=1 // loop_footer_branch
      %9 = sbr.rel target = $region3
    $region8: #{_conv2d_batchnorm.3} parent=1 // loop_exit
      _

// kernel: _conv2d_batchnorm.2
$region0: #{_conv2d_batchnorm.2}
  #allocation0 [shape = 'u32[]', space=smem, size = 0x4, offset = 0x4, fixed_abs, tag = 'smem constant byte address 0x4 - core index']
  #allocation1 [shape = 'u32[144,128]{1,0:T(1,128)}', space=vmem, size = 0x12000, scoped, tag = 'internal scratch']
  %s0 = inlined_call_operand.vmem [shape: f32[8,36], index: 0, kind: input, shape index: {}]
  %s1 = inlined_call_operand.vmem [shape: f32[36,512], index: 1, kind: input, shape index: {}]
  %s2 = inlined_call_operand.vmem [shape: f32[8,1], index: 2, kind: output, shape index: {0}]
  %s3 = inlined_call_operand.vmem [shape: f32[8,1], index: 3, kind: output, shape index: {1}]
  %4 = xla_tuple %s2, %s3
  %s5 = sld [smem:[#allocation0]]
  $region91: #{_conv2d_batchnorm.2} parent=0
    _
  %s7 = ssub.s32 1, %s5
  %s8 = scalar_select 0, %s7, %s5
  $region1: #{_conv2d_batchnorm.2} parent=0
    #allocation2 [shape = 'u8[40960]{0}', space=vmem, size = 0xa000, scoped, tag = 'input window, operand 1']
    loop: start=0, step=1, limit=6
    $region2: #{_conv2d_batchnorm.2} parent=1 // loop_pre_header
      _
    $region3: #{_conv2d_batchnorm.2} parent=1 // loop_header
      %s10 = sphi 0, %s14
      %p11 = scmp.ge.s32.totalorder %s10, 6
      %s18 = sphi 0, %s18
      %s20 = sphi 0, %s18
      %s21 = sphi 0, %s20
      %s35 = sphi 0, %s21
      %s41 = sphi 0, %s43
      %s44 = sphi 0, %s41
      %s45 = sphi 0, %s44
      %s61 = sphi 0, %s45
      %s65 = sphi 0, %s65
      %s67 = sphi 0, %s65
      %s68 = sphi 0, %s67
      %s82 = sphi 0, %s68
      %s86 = sphi 0, %s86
      %s88 = sphi 0, %s86
      %s89 = sphi 0, %s88
      %s103 = sphi 0, %s89
    $region4: #{_conv2d_batchnorm.2} parent=1 // loop_header_branch
      %13 = sbr.rel (%p11) target = $region8
    $region5: #{_conv2d_batchnorm.2} parent=1 // loop_body
      %s15 = ssub.s32 %s10, 1
      %s16 = ssub.s32 %s10, 2
      %s17 = sadd.s32 %s10, 1
      %s19 = sadd.s32 %s18, 1
      %p22 = scmp.eq.s32.totalorder %s10, 3
      %p23 = scmp.ne.s32.totalorder %s18, %s20
      %p24 = scmp.eq.s32.totalorder %s10, 0
      %p25 = por %p23, %p24
      %p26 = scmp.ne.s32.totalorder %s18, %s20
      %p27 = scmp.eq.s32.totalorder %s15, 3
      %p28 = por %p26, %p27
      %p29 = scmp.ne.s32.totalorder %s20, %s21
      %p30 = scmp.eq.s32.totalorder %s15, 0
      %p31 = por %p29, %p30
      %p32 = scmp.ne.s32.totalorder %s20, %s21
      %p33 = scmp.eq.s32.totalorder %s16, 3
      %p34 = por %p32, %p33
      %p36 = scmp.ne.s32.totalorder %s21, %s35
      %p37 = scmp.eq.s32.totalorder %s16, 0
      %p38 = por %p36, %p37
      %s39 = ssub.s32 %s10, %s17
      %p40 = scmp.eq.s32.totalorder %s39, 0
      %s42 = sadd.s32 %s41, 1
      %s43 = scalar_select %p40, %s41, %s42
      %p46 = pneg %p40
      %p47 = scmp.eq.s32.totalorder %s10, 3
      %p48 = por %p46, %p47
      %p49 = scmp.ne.s32.totalorder %s41, %s44
      %p50 = scmp.eq.s32.totalorder %s10, 0
      %p51 = por %p49, %p50
      %p52 = scmp.ne.s32.totalorder %s41, %s44
      %p53 = scmp.eq.s32.totalorder %s15, 3
      %p54 = por %p52, %p53
      %p55 = scmp.ne.s32.totalorder %s44, %s45
      %p56 = scmp.eq.s32.totalorder %s15, 0
      %p57 = por %p55, %p56
      %p58 = scmp.ne.s32.totalorder %s44, %s45
      %p59 = scmp.eq.s32.totalorder %s16, 3
      %p60 = por %p58, %p59
      %p62 = scmp.ne.s32.totalorder %s45, %s61
      %p63 = scmp.eq.s32.totalorder %s16, 0
      %p64 = por %p62, %p63
      %s66 = sadd.s32 %s65, 1
      %p69 = scmp.eq.s32.totalorder %s10, 3
      %p70 = scmp.ne.s32.totalorder %s65, %s67
      %p71 = scmp.eq.s32.totalorder %s10, 0
      %p72 = por %p70, %p71
      %p73 = scmp.ne.s32.totalorder %s65, %s67
      %p74 = scmp.eq.s32.totalorder %s15, 3
      %p75 = por %p73, %p74
      %p76 = scmp.ne.s32.totalorder %s67, %s68
      %p77 = scmp.eq.s32.totalorder %s15, 0
      %p78 = por %p76, %p77
      %p79 = scmp.ne.s32.totalorder %s67, %s68
      %p80 = scmp.eq.s32.totalorder %s16, 3
      %p81 = por %p79, %p80
      %p83 = scmp.ne.s32.totalorder %s68, %s82
      %p84 = scmp.eq.s32.totalorder %s16, 0
      %p85 = por %p83, %p84
      %s87 = sadd.s32 %s86, 1
      %p90 = scmp.eq.s32.totalorder %s10, 3
      %p91 = scmp.ne.s32.totalorder %s86, %s88
      %p92 = scmp.eq.s32.totalorder %s10, 0
      %p93 = por %p91, %p92
      %p94 = scmp.ne.s32.totalorder %s86, %s88
      %p95 = scmp.eq.s32.totalorder %s15, 3
      %p96 = por %p94, %p95
      %p97 = scmp.ne.s32.totalorder %s88, %s89
      %p98 = scmp.eq.s32.totalorder %s15, 0
      %p99 = por %p97, %p98
      %p100 = scmp.ne.s32.totalorder %s88, %s89
      %p101 = scmp.eq.s32.totalorder %s16, 3
      %p102 = por %p100, %p101
      %p104 = scmp.ne.s32.totalorder %s89, %s103
      %p105 = scmp.eq.s32.totalorder %s16, 0
      %p106 = por %p104, %p105
      %p107 = scmp.le.s32.totalorder 1, %s10
      %p108 = scmp.lt.s32.totalorder %s10, 5
      %p109 = pnand %p107, %p108
      %p110 = pneg %p109
      // Predicated region
      $region9: #{_conv2d_batchnorm.2} parent=5 // pred_check
        _
      $region10: #{_conv2d_batchnorm.2} parent=5 // pred_check_branch
        %112 = sbr.rel (%p109) target = $region12
      $region11: #{_conv2d_batchnorm.2} parent=5 // pred_region
        %s113 = ssub.s32 %s10, 1
        // Predicated region
        $region13: #{_conv2d_batchnorm.2} parent=11 // pred_check
          %p114 = pneg %p31
        $region14: #{_conv2d_batchnorm.2} parent=11 // pred_check_branch
          %116 = sbr.rel (%p114) target = $region16
        $region15: #{_conv2d_batchnorm.2} parent=11 // pred_region
          _
        $region16: #{_conv2d_batchnorm.2} parent=11 // pred_fallthru
          _
      $region12: #{_conv2d_batchnorm.2} parent=5 // pred_fallthru
        _
      %p117 = scmp.lt.s32.totalorder %s10, 4
      // Predicated region
      $region17: #{_conv2d_batchnorm.2} parent=5 // pred_check
        %p118 = pneg %p117
      $region18: #{_conv2d_batchnorm.2} parent=5 // pred_check_branch
        %120 = sbr.rel (%p118) target = $region20
      $region19: #{_conv2d_batchnorm.2} parent=5 // pred_region
        // Predicated region
        $region21: #{_conv2d_batchnorm.2} parent=19 // pred_check
          %p121 = pneg %p51
        $region22: #{_conv2d_batchnorm.2} parent=19 // pred_check_branch
          %123 = sbr.rel (%p121) target = $region24
        $region23: #{_conv2d_batchnorm.2} parent=19 // pred_region
          %s124 = sand.u32 %s41, 1
          %s125 = sand.u32 %s41, 1
          %s126 = smul.addr %s125, 40
          %s127 = scalar_lea.vmem [#allocation2], %s126
          %s128 = smul.addr %s10, 8
          %s129 = scalar_lea.vmem %s1, %s128
          // Predicated region
          $region25: #{_conv2d_batchnorm.2} parent=23 // pred_check
            _
          $region26: #{_conv2d_batchnorm.2} parent=23 // pred_check_branch
            %131 = sbr.rel (0) target = $region28
          $region27: #{_conv2d_batchnorm.2} parent=23 // pred_region
            // Predicated region
            $region29: #{_conv2d_batchnorm.2} parent=27 // pred_check
              _
            $region30: #{_conv2d_batchnorm.2} parent=27 // pred_check_branch
              %133 = sbr.rel (0) target = $region32
            $region31: #{_conv2d_batchnorm.2} parent=27 // pred_region
              // Predicated region
              $region44: #{_conv2d_batchnorm.2} parent=31 // pred_check
                _
              $region45: #{_conv2d_batchnorm.2} parent=31 // pred_check_branch
                %156 = sbr.rel (0) target = $region47
              $region46: #{_conv2d_batchnorm.2} parent=31 // pred_region
                loop: start=0, step=1, limit=1
                $region48: #{_conv2d_batchnorm.2} parent=46 // loop_pre_header
                  _
                $region49: #{_conv2d_batchnorm.2} parent=46 // loop_header
                  %s158 = sphi 0, %s162
                  %p159 = scmp.ge.s32.totalorder %s158, 1
                  %s163 = sphi %s129, %s129
                  %s164 = sphi %s127, %s127
                $region50: #{_conv2d_batchnorm.2} parent=46 // loop_header_branch
                  %161 = sbr.rel (%p159) target = $region54
                $region51: #{_conv2d_batchnorm.2} parent=46 // loop_body
                  %v165 = vld [vmem:[%s163] sm:$0xff]
                  %166 = vst [vmem:[%s164] sm:$0xff] %v165
                  %v167 = vld [vmem:[%s163 + $0x20] sm:$0xff]
                  %168 = vst [vmem:[%s164 + $0x8] sm:$0xff] %v167
                  %v169 = vld [vmem:[%s163 + $0x40] sm:$0xff]
                  %170 = vst [vmem:[%s164 + $0x10] sm:$0xff] %v169
                  %v171 = vld [vmem:[%s163 + $0x60] sm:$0xff]
                  %172 = vst [vmem:[%s164 + $0x18] sm:$0xff] %v171
                  %v173 = vld [vmem:[%s163 + $0x80] sm:$0xff]
                  %174 = vst [vmem:[%s164 + $0x20] sm:$0xff] %v173
                $region52: #{_conv2d_batchnorm.2} parent=46 // loop_footer
                  %s162 = sadd.s32 1, %s158
                $region53: #{_conv2d_batchnorm.2} parent=46 // loop_footer_branch
                  %157 = sbr.rel target = $region49
                $region54: #{_conv2d_batchnorm.2} parent=46 // loop_exit
                  _
              $region47: #{_conv2d_batchnorm.2} parent=31 // pred_fallthru
                _
              // Predicated region
              $region55: #{_conv2d_batchnorm.2} parent=31 // pred_check
                _
              $region56: #{_conv2d_batchnorm.2} parent=31 // pred_check_branch
                %176 = sbr.rel target = $region58
              $region57: #{_conv2d_batchnorm.2} parent=31 // pred_region
                _
              $region58: #{_conv2d_batchnorm.2} parent=31 // pred_fallthru
                _
            $region32: #{_conv2d_batchnorm.2} parent=27 // pred_fallthru
              _
            // Predicated region
            $region33: #{_conv2d_batchnorm.2} parent=27 // pred_check
              _
            $region34: #{_conv2d_batchnorm.2} parent=27 // pred_check_branch
              %135 = sbr.rel target = $region36
            $region35: #{_conv2d_batchnorm.2} parent=27 // pred_region
              loop: start=0, step=1, limit=1
              $region37: #{_conv2d_batchnorm.2} parent=35 // loop_pre_header
                _
              $region38: #{_conv2d_batchnorm.2} parent=35 // loop_header
                %s138 = sphi 0, %s142
                %p139 = scmp.ge.s32.totalorder %s138, 1
                %s143 = sphi %s129, %s129
                %s144 = sphi %s127, %s127
              $region39: #{_conv2d_batchnorm.2} parent=35 // loop_header_branch
                %141 = sbr.rel (%p139) target = $region43
              $region40: #{_conv2d_batchnorm.2} parent=35 // loop_body
                %v145 = vld [vmem:[%s143] sm:$0xff]
                %146 = vst [vmem:[%s144] sm:$0xff] %v145
                %v147 = vld [vmem:[%s143 + $0x20] sm:$0xff]
                %148 = vst [vmem:[%s144 + $0x8] sm:$0xff] %v147
                %v149 = vld [vmem:[%s143 + $0x40] sm:$0xff]
                %150 = vst [vmem:[%s144 + $0x10] sm:$0xff] %v149
                %v151 = vld [vmem:[%s143 + $0x60] sm:$0xff]
                %152 = vst [vmem:[%s144 + $0x18] sm:$0xff] %v151
                %v153 = vld [vmem:[%s143 + $0x80] sm:$0xff]
                %154 = vst [vmem:[%s144 + $0x20] sm:$0xff] %v153
              $region41: #{_conv2d_batchnorm.2} parent=35 // loop_footer
                %s142 = sadd.s32 1, %s138
              $region42: #{_conv2d_batchnorm.2} parent=35 // loop_footer_branch
                %137 = sbr.rel target = $region38
              $region43: #{_conv2d_batchnorm.2} parent=35 // loop_exit
                _
            $region36: #{_conv2d_batchnorm.2} parent=27 // pred_fallthru
              _
          $region28: #{_conv2d_batchnorm.2} parent=23 // pred_fallthru
            _
          %177 = vnop
        $region24: #{_conv2d_batchnorm.2} parent=19 // pred_fallthru
          _
      $region20: #{_conv2d_batchnorm.2} parent=5 // pred_fallthru
        _
      %p178 = scmp.le.s32.totalorder 1, %s10
      %p179 = scmp.lt.s32.totalorder %s10, 5
      %p180 = pnand %p178, %p179
      %p181 = pneg %p180
      // Predicated region
      $region59: #{_conv2d_batchnorm.2} parent=5 // pred_check
        _
      $region60: #{_conv2d_batchnorm.2} parent=5 // pred_check_branch
        %183 = sbr.rel (%p180) target = $region62
      $region61: #{_conv2d_batchnorm.2} parent=5 // pred_region
        %s184 = ssub.s32 %s10, 1
        %s185 = sand.u32 %s44, 1
        %s186 = sand.u32 %s44, 1
        %s187 = smul.addr %s186, 40
        %s188 = scalar_lea.vmem [#allocation2], %s187
        // Predicated region
        $region63: #{_conv2d_batchnorm.2} parent=61 // pred_check
          %p189 = pneg %p57
        $region64: #{_conv2d_batchnorm.2} parent=61 // pred_check_branch
          %191 = sbr.rel (%p189) target = $region66
        $region65: #{_conv2d_batchnorm.2} parent=61 // pred_region
          _
        $region66: #{_conv2d_batchnorm.2} parent=61 // pred_fallthru
          _
        %p192 = pneg %p31
        %p193 = pneg %p28
        %s194 = sand.u32 %s44, 1
        %s195 = sand.u32 %s44, 1
        %s196 = smul.addr %s195, 40
        %s197 = scalar_lea.vmem [#allocation2], %s196
        %p198 = pneg %p57
        %p199 = pneg %p54
        %p200 = pneg %p78
        %p201 = pneg %p75
        %p202 = pneg %p99
        %p203 = pneg %p96
        %p204 = scmp.eq.s32.totalorder %s15, 0
        // Predicated region
        $region67: #{_conv2d_batchnorm.2} parent=61 // pred_check
          %p205 = pneg %p204
        $region68: #{_conv2d_batchnorm.2} parent=61 // pred_check_branch
          %207 = sbr.rel (%p205) target = $region70
        $region69: #{_conv2d_batchnorm.2} parent=61 // pred_region
          %vm208 = vcmask 7168
          %209 = vst.msk [vmem:[%s2] sm:$0xff] %vm208, 0.0
          %210 = vst.msk [vmem:[%s3] sm:$0xff] %vm208, 0.0
        $region70: #{_conv2d_batchnorm.2} parent=61 // pred_fallthru
          _
        %v211 = vld [vmem:[%s0] sm:$0xff]
        %v212 = vld [vmem:[%s188] sm:$0xff]
        %v213 = vld [vmem:[%s188 + $0x8] sm:$0xff]
        %v214 = vld [vmem:[%s188 + $0x10] sm:$0xff]
        %v215 = vld [vmem:[%s188 + $0x18] sm:$0xff]
        %v216 = vld [vmem:[%s188 + $0x20] sm:$0xf]
        %vm217 = vcmask 293888
        %v219 = vsel %vm217, %v211, 0
        %vm221 = vcmask 1043456
        %v223 = vsel %vm221, %v216, 0
        %225 = vmatprep.subr.mxu0 0.0
        %226 = vmatpush1.msra.mxu0 %v212
        %227 = vmatprep.subr.mxu0 0.0
        %228 = vmatpush1.msra.mxu0 %v213
        %229 = vmatprep.subr.mxu0 0.0
        %230 = vmatpush1.msra.mxu0 %v214
        %231 = vmatprep.subr.mxu0 0.0
        %232 = vmatpush1.msra.mxu0 %v215
        %233 = vmatprep.subr.mxu0 0.0
        %234 = vmatpush1.msra.mxu0 %v223
        %235 = vmatprep.subr.mxu0 0.0
        %236 = vmatpush1.msra.mxu0 0.0
        %237 = vmatprep.subr.mxu0 0.0
        %238 = vmatpush1.msra.mxu0 0.0
        %239 = vmatprep.subr.mxu0 0.0
        %240 = vmatpush1.msra.mxu0 0.0
        %241 = vmatprep.subr.mxu0 0.0
        %242 = vmatpush1.msra.mxu0 0.0
        %243 = vmatprep.subr.mxu0 0.0
        %244 = vmatpush1.msra.mxu0 0.0
        %245 = vmatprep.subr.mxu0 0.0
        %246 = vmatpush1.msra.mxu0 0.0
        %247 = vmatprep.subr.mxu0 0.0
        %248 = vmatpush1.msra.mxu0 0.0
        %249 = vmatprep.subr.mxu0 0.0
        %250 = vmatpush1.msra.mxu0 0.0
        %251 = vmatprep.subr.mxu0 0.0
        %252 = vmatpush1.msra.mxu0 0.0
        %253 = vmatprep.subr.mxu0 0.0
        %254 = vmatpush1.msra.mxu0 0.0
        %255 = vmatprep.subr.mxu0 0.0
        %256 = vmatpush1.msra.mxu0 0.0
        %257 = vmatprep.subr.mxu0 0.0
        %258 = vmatpush1.msra.mxu0 0.0
        %259 = vmatprep.subr.mxu0 0.0
        %260 = vmatpush1.msra.mxu0 0.0
        %261 = vmatprep.subr.mxu0 0.0
        %262 = vmatpush1.msra.mxu0 0.0
        %263 = vmatprep.subr.mxu0 0.0
        %264 = vmatpush1.msra.mxu0 0.0
        %265 = vmatprep.subr.mxu0 0.0
        %266 = vmatpush1.msra.mxu0 0.0
        %267 = vmatprep.subr.mxu0 0.0
        %268 = vmatpush1.msra.mxu0 0.0
        %269 = vmatprep.subr.mxu0 0.0
        %270 = vmatpush1.msra.mxu0 0.0
        %271 = vmatprep.subr.mxu0 0.0
        %272 = vmatpush1.msra.mxu0 0.0
        %273 = vmatprep.subr.mxu0 0.0
        %274 = vmatpush1.msra.mxu0 0.0
        %275 = vmatprep.subr.mxu0 0.0
        %276 = vmatpush1.msra.mxu0 0.0
        %277 = vmatprep.subr.mxu0 0.0
        %278 = vmatpush1.msra.mxu0 0.0
        %279 = vmatprep.subr.mxu0 0.0
        %280 = vmatpush1.msra.mxu0 0.0
        %281 = vmatprep.subr.mxu0 0.0
        %282 = vmatpush1.msra.mxu0 0.0
        %283 = vmatprep.subr.mxu0 0.0
        %284 = vmatpush1.msra.mxu0 0.0
        %285 = vmatprep.subr.mxu0 0.0
        %286 = vmatpush1.msra.mxu0 0.0
        %287 = vmatprep.subr.mxu0 0.0
        %288 = vmatpush1.msra.mxu0 0.0
        %289 = vmatprep.mubr.f32.mxu0 0.0
        %290 = vmatmul.mubr.f32.gmra.mrb[0].mxu0 %v219
        %v291 = vpop.f32.mrb[0].mxu0
        %v292 = vadd.f32 0.0, %v291
        %v293 = vpop.f32.mrb[0].mxu0
        %294 = vdwg.mxu0
        %v295 = vld [vmem:[%s2] sm:$0xff]
        %296 = vadd.xlane.f32.xlu0 %v292
        %v297 = vpop.xlane.xlu0 %296
        %v298 = vadd.f32 %v295, %v297
        %vm299 = vcmask 7168
        %300 = vst.msk [vmem:[%s2] sm:$0xff] %vm299, %v298
        %v301 = vld [vmem:[%s3] sm:$0xff]
        %v302 = vmul.f32 %v292, %v292
        %303 = vadd.xlane.f32.xlu0 %v302
        %v304 = vpop.xlane.xlu0 %303
        %v305 = vadd.f32 %v301, %v304
        %306 = vst.msk [vmem:[%s3] sm:$0xff] %vm299, %v305
        // Predicated region
        $region71: #{_conv2d_batchnorm.2} parent=61 // pred_check
          %p307 = pneg %p75
        $region72: #{_conv2d_batchnorm.2} parent=61 // pred_check_branch
          %309 = sbr.rel (%p307) target = $region74
        $region73: #{_conv2d_batchnorm.2} parent=61 // pred_region
          _
        $region74: #{_conv2d_batchnorm.2} parent=61 // pred_fallthru
          _
        // Predicated region
        $region75: #{_conv2d_batchnorm.2} parent=61 // pred_check
          %p310 = pneg %p96
        $region76: #{_conv2d_batchnorm.2} parent=61 // pred_check_branch
          %312 = sbr.rel (%p310) target = $region78
        $region77: #{_conv2d_batchnorm.2} parent=61 // pred_region
          _
        $region78: #{_conv2d_batchnorm.2} parent=61 // pred_fallthru
          _
        // Predicated region
        $region79: #{_conv2d_batchnorm.2} parent=61 // pred_check
          %p313 = pneg %p75
        $region80: #{_conv2d_batchnorm.2} parent=61 // pred_check_branch
          %315 = sbr.rel (%p313) target = $region82
        $region81: #{_conv2d_batchnorm.2} parent=61 // pred_region
          _
        $region82: #{_conv2d_batchnorm.2} parent=61 // pred_fallthru
          _
        // Predicated region
        $region83: #{_conv2d_batchnorm.2} parent=61 // pred_check
          %p316 = pneg %p96
        $region84: #{_conv2d_batchnorm.2} parent=61 // pred_check_branch
          %318 = sbr.rel (%p316) target = $region86
        $region85: #{_conv2d_batchnorm.2} parent=61 // pred_region
          _
        $region86: #{_conv2d_batchnorm.2} parent=61 // pred_fallthru
          _
      $region62: #{_conv2d_batchnorm.2} parent=5 // pred_fallthru
        _
      %p319 = scmp.le.s32.totalorder 2, %s10
      // Predicated region
      $region87: #{_conv2d_batchnorm.2} parent=5 // pred_check
        %p320 = pneg %p319
      $region88: #{_conv2d_batchnorm.2} parent=5 // pred_check_branch
        %322 = sbr.rel (%p320) target = $region90
      $region89: #{_conv2d_batchnorm.2} parent=5 // pred_region
        %s323 = ssub.s32 %s10, 2
      $region90: #{_conv2d_batchnorm.2} parent=5 // pred_fallthru
        _
    $region6: #{_conv2d_batchnorm.2} parent=1 // loop_footer
      %s14 = sadd.s32 1, %s10
    $region7: #{_conv2d_batchnorm.2} parent=1 // loop_footer_branch
      %9 = sbr.rel target = $region3
    $region8: #{_conv2d_batchnorm.2} parent=1 // loop_exit
      _

</llo_original>
